<compile_context>
chip_gen: v7x
topology: tpu7x:2x2x1
jax: 0.10.0
libtpu: 0.0.40
codegen_flags: <defaults>
</compile_context>

<pallas_src>
import jax
import jax.numpy as jnp
from jax.experimental import pallas as pl
from jax.experimental.pallas import tpu as pltpu


def linear_sigmoid_kernel(w_ref, b_ref, xt_ref, o_ref):
    # w_ref: (2,) f32 in SMEM, b_ref: (1,) f32 in SMEM
    # xt_ref: (2, S, W) f32 in VMEM (xt_ref[0] = feature 0, xt_ref[1] = feature 1)
    # o_ref : (S, W)    f32 in VMEM (dense sublane+lane output block)
    w0 = w_ref[0]
    w1 = w_ref[1]
    b = b_ref[0]

    z = xt_ref[0] * w0 + xt_ref[1] * w1 + b        # (S, W), pure VPU
    # Exact sigmoid with one EUP transcendental per element.
    o_ref[...] = (0.5 * jnp.tanh(0.5 * z) + 0.5).astype(o_ref.dtype)


# ---- block / grid sizing -----------------------------------------------------
_LANE = 512                 # lane width of the streamed slab (multiple of 128)
_SUB = 8                    # sublane granularity
_MAX_ROWS_PER_STEP = 1024   # 1024*512 = 512K elems/step -> 6 MB HBM traffic,
                            # 12 MiB double-buffered VMEM (fits v5e/v6e/v7x defaults)
_MIN_ROWS_PER_STEP = 512    # don't split below 256K elems/step (keeps the ~0.35us
                            # per-step overhead a small fraction of DMA time)
_MIN_STEPS = 8              # enough steps for DMA/compute overlap + v7x 2-TC split


def _round_up(x, m):
    return -(-x // m) * m


def _choose_layout(n):
    """Returns (lane, rows_per_step, steps); rows_per_step % 8 == 0, lane % 128 == 0."""
    rows = _round_up(pl.cdiv(n, _LANE), _SUB)
    steps = max(
        1,
        pl.cdiv(rows, _MAX_ROWS_PER_STEP),              # respect per-step VMEM cap
        min(_MIN_STEPS, rows // _MIN_ROWS_PER_STEP),    # split only if steps stay big
    )
    if steps > 1 and steps % 2:
        steps += 1            # even grid -> clean two-TensorCore split on v7x
    rows_per_step = _round_up(pl.cdiv(rows, steps), _SUB)
    return _LANE, rows_per_step, steps


def sigmoid_linear_forward(x, weight, bias):
    """x: (N, 2) f32, weight: (1, 2) f32, bias: (1,) f32 -> (N, 1) f32."""
    n, d_in = x.shape
    d_out = weight.shape[0]
    assert d_in == 2 and d_out == 1

    lane, rows_per_step, steps = _choose_layout(n)
    rows_pad = rows_per_step * steps
    n_pad = rows_pad * lane

    # Layout plumbing (fused under jit): SoA, sublane+lane dense (2, rows_pad, lane).
    xt = jnp.transpose(x)                              # (2, N)
    if n_pad != n:
        xt = jnp.pad(xt, ((0, 0), (0, n_pad - n)))     # zero-pad tail
    xt = xt.reshape(2, rows_pad, lane)

    w_flat = weight.reshape(d_in).astype(jnp.float32)   # (2,) scalars for SMEM
    b_flat = bias.reshape(d_out).astype(jnp.float32)    # (1,) scalar for SMEM

    out = pl.pallas_call(
        linear_sigmoid_kernel,
        out_shape=jax.ShapeDtypeStruct((rows_pad, lane), jnp.float32),
        grid_spec=pl.GridSpec(
            grid=(steps,),
            in_specs=[
                # Tiny params: SMEM scalars (no per-tile DMA, no (8,128) padding).
                pl.BlockSpec(memory_space=pltpu.MemorySpace.SMEM),
                pl.BlockSpec(memory_space=pltpu.MemorySpace.SMEM),
                # Streaming input: dense (2, S, W) blocks (S % 8 == 0, W % 128 == 0).
                pl.BlockSpec((2, rows_per_step, lane), lambda i: (0, i, 0)),
            ],
            # Dense (S, W) output blocks -> unmasked wide stores.
            out_specs=pl.BlockSpec((rows_per_step, lane), lambda i: (i, 0)),
        ),
        compiler_params=pltpu.CompilerParams(
            dimension_semantics=("parallel",),
            # Explicit headroom; double-buffered blocks peak at ~12 MiB.
            vmem_limit_bytes=32 * 1024 * 1024,
        ),
    )(w_flat, b_flat, xt)

    # Back to the PyTorch-facing (N, 1) shape; flat order is preserved.
    return out.reshape(-1)[:n].reshape(n, 1)


if __name__ == "__main__":
    key = jax.random.PRNGKey(0)
    kx, kw, kb = jax.random.split(key, 3)

    # Small shapes consistent with the module: Linear(2, 1) -> x is (batch, 2).
    N, D_IN, D_OUT = 8, 2, 1
    x = jax.random.normal(kx, (N, D_IN), dtype=jnp.float32)

    # Deterministic parameter init (mimics nn.Linear uniform(-1/sqrt(fan_in), ...)).
    bound = 1.0 / jnp.sqrt(jnp.float32(D_IN))
    weight = jax.random.uniform(kw, (D_OUT, D_IN), jnp.float32, -bound, bound)
    bias = jax.random.uniform(kb, (D_OUT,), jnp.float32, -bound, bound)

    # Jit the whole forward so the layout plumbing fuses with the pallas_call.
    fwd = jax.jit(sigmoid_linear_forward)
    out = jax.block_until_ready(fwd(x, weight, bias))

    # Sanity check against plain-JAX reference (exact sigmoid -> tight tolerance).
    ref = jax.nn.sigmoid(x @ weight.T + bias)
    assert out.shape == (N, D_OUT)
    assert jnp.allclose(out, ref, atol=1e-4, rtol=1e-4), float(jnp.max(jnp.abs(out - ref)))

    print("KERNEL_OK")
</pallas_src>

<mosaic_0001>
module attributes {stable_mosaic.version = 11 : i64} {
  func.func @linear_sigmoid_kernel(%arg0: i32, %arg1: memref<2xf32, #tpu.memory_space<smem>>, %arg2: memref<1xf32, #tpu.memory_space<smem>>, %arg3: memref<2x8x512xf32, #tpu.memory_space<vmem>>, %arg4: memref<8x512xf32, #tpu.memory_space<vmem>>) attributes {dimension_semantics = [#tpu.dimension_semantics<parallel>], iteration_bounds = array<i64: 1>, scalar_prefetch = 0 : i64, scratch_operands = 0 : i64, tpu.core_type = #tpu.core_type<tc>, window_params = [{transform_indices = @transform_0, window_bounds = array<i64: 2>}, {transform_indices = @transform_1, window_bounds = array<i64: 1>}, {transform_indices = @transform_2, window_bounds = array<i64: 2, 8, 512>}, {transform_indices = @transform_3, window_bounds = array<i64: 8, 512>}]} {
    %c0 = arith.constant 0 : index
    %0 = memref.load %arg1[%c0] : memref<2xf32, #tpu.memory_space<smem>>
    %c1 = arith.constant 1 : index
    %1 = memref.load %arg1[%c1] : memref<2xf32, #tpu.memory_space<smem>>
    %c0_0 = arith.constant 0 : index
    %2 = memref.load %arg2[%c0_0] : memref<1xf32, #tpu.memory_space<smem>>
    %c0_1 = arith.constant 0 : index
    %c0_2 = arith.constant 0 : index
    %c0_3 = arith.constant 0 : index
    %3 = vector.load %arg3[%c0_1, %c0_2, %c0_3] : memref<2x8x512xf32, #tpu.memory_space<vmem>>, vector<1x8x512xf32>
    %4 = vector.shape_cast %3 : vector<1x8x512xf32> to vector<8x512xf32>
    %5 = vector.broadcast %0 : f32 to vector<8x512xf32>
    %6 = arith.mulf %4, %5 : vector<8x512xf32>
    %c1_4 = arith.constant 1 : index
    %c0_5 = arith.constant 0 : index
    %c0_6 = arith.constant 0 : index
    %7 = vector.load %arg3[%c1_4, %c0_5, %c0_6] : memref<2x8x512xf32, #tpu.memory_space<vmem>>, vector<1x8x512xf32>
    %8 = vector.shape_cast %7 : vector<1x8x512xf32> to vector<8x512xf32>
    %9 = vector.broadcast %1 : f32 to vector<8x512xf32>
    %10 = arith.mulf %8, %9 : vector<8x512xf32>
    %11 = arith.addf %6, %10 : vector<8x512xf32>
    %12 = vector.broadcast %2 : f32 to vector<8x512xf32>
    %13 = arith.addf %11, %12 : vector<8x512xf32>
    %cst = arith.constant 5.000000e-01 : f32
    %14 = vector.broadcast %cst : f32 to vector<8x512xf32>
    %15 = arith.mulf %14, %13 : vector<8x512xf32>
    %16 = math.tanh %15 : vector<8x512xf32>
    %cst_7 = arith.constant 5.000000e-01 : f32
    %17 = vector.broadcast %cst_7 : f32 to vector<8x512xf32>
    %18 = arith.mulf %17, %16 : vector<8x512xf32>
    %cst_8 = arith.constant 5.000000e-01 : f32
    %19 = vector.broadcast %cst_8 : f32 to vector<8x512xf32>
    %20 = arith.addf %18, %19 : vector<8x512xf32>
    %c0_9 = arith.constant 0 : index
    %c0_10 = arith.constant 0 : index
    %21 = vector.load %arg4[%c0_9, %c0_10] : memref<8x512xf32, #tpu.memory_space<vmem>>, vector<8x512xf32>
    tpu.vector_store %arg4[%c0_9, %c0_10], %20 {strides = array<i32>} : memref<8x512xf32, #tpu.memory_space<vmem>>, vector<8x512xf32>,
    return
  }
  func.func @transform_0(%arg0: i32) -> i32 {
    %c0_i32 = arith.constant 0 : i32
    %c0_i32_0 = arith.constant 0 : i32
    return %c0_i32 : i32
  }
  func.func @transform_1(%arg0: i32) -> i32 {
    %c0_i32 = arith.constant 0 : i32
    %c0_i32_0 = arith.constant 0 : i32
    return %c0_i32 : i32
  }
  func.func @transform_2(%arg0: i32) -> (i32, i32, i32) {
    %c0_i32 = arith.constant 0 : i32
    %c0_i32_0 = arith.constant 0 : i32
    %c0_i32_1 = arith.constant 0 : i32
    return %c0_i32, %arg0, %c0_i32_0 : i32, i32, i32
  }
  func.func @transform_3(%arg0: i32) -> (i32, i32) {
    %c0_i32 = arith.constant 0 : i32
    %c0_i32_0 = arith.constant 0 : i32
    return %arg0, %c0_i32 : i32, i32
  }
}

</mosaic_0001>

<llo_original>
// kernel: sigmoid_linear_forward.1
$region0: #{sigmoid_linear_forward.1}
  #allocation0 [shape = 'u32[]', space=smem, size = 0x4, offset = 0x4, fixed_abs, tag = 'smem constant byte address 0x4 - core index']
  #allocation1 [shape = 'u32[144,128]{1,0:T(1,128)}', space=vmem, size = 0x12000, scoped, tag = 'internal scratch']
  #allocation2 [shape = 'f32[1]{0:T(128)S(6)}', space=smem, size = 0x200, scoped, tag = 'scoped memory for sigmoid_linear_forward.1']
  %s0 = inlined_call_operand.vmem [shape: f32[2], index: 0, kind: input, shape index: {}]
  %s1 = inlined_call_operand.<no memory space> [shape: f32[1], index: 1, kind: input, shape index: {}]
  %s2 = inlined_call_operand.vmem [shape: f32[2,8,512], index: 2, kind: input, shape index: {}]
  %s3 = inlined_call_operand.vmem [shape: f32[8,512], index: 3, kind: output, shape index: {}]
  %s4 = sld [smem:[#allocation0]]
  $region26: #{sigmoid_linear_forward.1} parent=0
    _
  %s6 = ssub.s32 1, %s4
  %s7 = scalar_select 0, %s6, %s4
  %8 = sst [smem:[#allocation2]] %s1
  $region1: #{sigmoid_linear_forward.1} parent=0
    #allocation3 [shape = 'u8[512]{0}', space=smem, size = 0x200, scoped, tag = 'input window, operand 0, single buffered']
    #allocation4 [shape = 's32[1]{0}', space=sflag, size = 0x4, scoped, tag = 'scoped memory for sigmoid_linear_forward.1']
    %9 = vsyncpa [#allocation4], 0
    // Predicated region
    $region2: #{sigmoid_linear_forward.1} parent=1 // pred_check
      _
    $region3: #{sigmoid_linear_forward.1} parent=1 // pred_check_branch
      %11 = sbr.rel (0) target = $region5
    $region4: #{sigmoid_linear_forward.1} parent=1 // pred_region
      %s13 = ssub.s32 16, 16
      %14 = vsyncadd [#allocation4], %s13
      %s16 = sshll.u32 %s0, 4
      %s17 = int_to_ptr.vmem [resolvable:$true] %s16
      %19 = dma.vmem_to_smem %s17, 16, [#allocation3], [#allocation4]
    $region5: #{sigmoid_linear_forward.1} parent=1 // pred_fallthru
      _
    // Predicated region
    $region6: #{sigmoid_linear_forward.1} parent=1 // pred_check
      _
    $region7: #{sigmoid_linear_forward.1} parent=1 // pred_check_branch
      %21 = sbr.rel (0) target = $region9
    $region8: #{sigmoid_linear_forward.1} parent=1 // pred_region
      _
    $region9: #{sigmoid_linear_forward.1} parent=1 // pred_fallthru
      _
    // Predicated region
    $region10: #{sigmoid_linear_forward.1} parent=1 // pred_check
      _
    $region11: #{sigmoid_linear_forward.1} parent=1 // pred_check_branch
      %23 = sbr.rel (0) target = $region13
    $region12: #{sigmoid_linear_forward.1} parent=1 // pred_region
      _
    $region13: #{sigmoid_linear_forward.1} parent=1 // pred_fallthru
      _
    // Predicated region
    $region14: #{sigmoid_linear_forward.1} parent=1 // pred_check
      _
    $region15: #{sigmoid_linear_forward.1} parent=1 // pred_check_branch
      %25 = sbr.rel (0) target = $region17
    $region16: #{sigmoid_linear_forward.1} parent=1 // pred_region
      %26 = dma.done [#allocation4], 16
    $region17: #{sigmoid_linear_forward.1} parent=1 // pred_fallthru
      _
    %27 = sfence
    %s28 = sld [smem:[#allocation3]]
    %s29 = sld [smem:[#allocation3 + $0x1]]
    %s30 = sld [smem:[#allocation2]]
    %v31 = vld [vmem:[%s2] sm:$0xff]
    %v32 = vld [vmem:[%s2 + $0x8] sm:$0xff]
    %v33 = vld [vmem:[%s2 + $0x10] sm:$0xff]
    %v34 = vld [vmem:[%s2 + $0x18] sm:$0xff]
    %v35 = vstv %s28
    %v36 = vmul.f32 %v31, %v35
    %v37 = vmul.f32 %v32, %v35
    %v38 = vmul.f32 %v33, %v35
    %v39 = vmul.f32 %v34, %v35
    %s40 = scalar_lea.vmem %s2, 32
    %v41 = vld [vmem:[%s40] sm:$0xff]
    %v42 = vld [vmem:[%s40 + $0x8] sm:$0xff]
    %v43 = vld [vmem:[%s40 + $0x10] sm:$0xff]
    %v44 = vld [vmem:[%s40 + $0x18] sm:$0xff]
    %v45 = vstv %s29
    %v46 = vmul.f32 %v41, %v45
    %v47 = vmul.f32 %v42, %v45
    %v48 = vmul.f32 %v43, %v45
    %v49 = vmul.f32 %v44, %v45
    %v50 = vadd.f32 %v36, %v46
    %v51 = vadd.f32 %v37, %v47
    %v52 = vadd.f32 %v38, %v48
    %v53 = vadd.f32 %v39, %v49
    %v54 = vstv %s30
    %v55 = vadd.f32 %v50, %v54
    %v56 = vadd.f32 %v51, %v54
    %v57 = vadd.f32 %v52, %v54
    %v58 = vadd.f32 %v53, %v54
    %v59 = vmul.f32 %v55, 0.5
    %v60 = vmul.f32 %v56, 0.5
    %v61 = vmul.f32 %v57, 0.5
    %v62 = vmul.f32 %v58, 0.5
    %v63 = vtanh.pop %v59
    %v64 = vtanh.pop %v60
    %v65 = vtanh.pop %v61
    %v66 = vtanh.pop %v62
    %v67 = vmul.f32 %v63, 0.5
    %v68 = vmul.f32 %v64, 0.5
    %v69 = vmul.f32 %v65, 0.5
    %v70 = vmul.f32 %v66, 0.5
    %v71 = vadd.f32 %v67, 0.5
    %v72 = vadd.f32 %v68, 0.5
    %v73 = vadd.f32 %v69, 0.5
    %v74 = vadd.f32 %v70, 0.5
    %75 = vst [vmem:[%s3] sm:$0xff] %v71
    %76 = vst [vmem:[%s3 + $0x8] sm:$0xff] %v72
    %77 = vst [vmem:[%s3 + $0x10] sm:$0xff] %v73
    %78 = vst [vmem:[%s3 + $0x18] sm:$0xff] %v74
    // Predicated region
    $region18: #{sigmoid_linear_forward.1} parent=1 // pred_check
      _
    $region19: #{sigmoid_linear_forward.1} parent=1 // pred_check_branch
      %80 = sbr.rel (0) target = $region21
    $region20: #{sigmoid_linear_forward.1} parent=1 // pred_region
      _
    $region21: #{sigmoid_linear_forward.1} parent=1 // pred_fallthru
      _
    // Predicated region
    $region22: #{sigmoid_linear_forward.1} parent=1 // pred_check
      _
    $region23: #{sigmoid_linear_forward.1} parent=1 // pred_check_branch
      %82 = sbr.rel (0) target = $region25
    $region24: #{sigmoid_linear_forward.1} parent=1 // pred_region
      _
    $region25: #{sigmoid_linear_forward.1} parent=1 // pred_fallthru
      _
    %83 = vsyncpa [#allocation4], 1

</llo_original>
